<compile_context>
chip_gen: v7x
topology: tpu7x:2x2x1
jax: 0.10.0
libtpu: 0.0.40
codegen_flags: <defaults>
</compile_context>

<pallas_src>
import functools

import jax
import jax.numpy as jnp
from jax.experimental import pallas as pl
from jax.experimental.pallas import tpu as pltpu

BN_EPS = 1e-5
LANE = 128
SUBLANE = 8
VMEM_LIMIT = 32 * 1024 * 1024          # safe on v5e/v6e (128 MiB) and v7x (64 MiB)
FUSED_VMEM_BUDGET = 12 * 1024 * 1024   # threshold for the single-pass fused path


def _round_up(x, m):
    return ((x + m - 1) // m) * m


# ---------------------------------------------------------------------------
# Fused single-pass kernel: whole batch resident in VMEM (no grid).
# ---------------------------------------------------------------------------
def _fused_kernel(z_ref, w1_ref, b1_ref, gamma_ref, beta_ref, w2_ref, b2_ref,
                  o_ref, *, n_valid):
    h = jnp.dot(z_ref[...], w1_ref[...], preferred_element_type=jnp.float32)
    h = jnp.maximum(h + b1_ref[...], 0.0)                         # (B, Hp)

    # Batch statistics on the (otherwise idle) MXU instead of cross-vreg VALU adds.
    ones = jnp.ones((1, h.shape[0]), jnp.float32)
    s = jnp.dot(ones, h, preferred_element_type=jnp.float32)      # (1, Hp)
    sq = jnp.dot(ones, h * h, preferred_element_type=jnp.float32)  # (1, Hp)

    inv_n = 1.0 / n_valid
    mean = s * inv_n
    var = jnp.maximum(sq * inv_n - mean * mean, 0.0)              # biased variance
    inv_std = jax.lax.rsqrt(var + BN_EPS)                         # EUP slot
    scale = gamma_ref[...] * inv_std
    shift = beta_ref[...] - mean * scale

    y = h * scale + shift
    out = jnp.dot(y, w2_ref[...], preferred_element_type=jnp.float32)
    o_ref[...] = (out + b2_ref[...]).astype(o_ref.dtype)


# ---------------------------------------------------------------------------
# Two-pass fallback, pass 1: per-core partial sum / sum-of-squares of
# relu(z @ w1 + b1).  Leading "parallel" axis = TensorCore partials (v7x),
# trailing "arbitrary" axis = batch-tile reduction into the resident block.
# ---------------------------------------------------------------------------
def _bn_stats_kernel(z_ref, w1_ref, b1_ref, stats_ref):
    @pl.when(pl.program_id(1) == 0)
    def _():
        stats_ref[...] = jnp.zeros_like(stats_ref)

    h = jnp.dot(z_ref[...], w1_ref[...], preferred_element_type=jnp.float32)
    h = jnp.maximum(h + b1_ref[...], 0.0)                         # (tile, Hp)

    # Axis-0 reductions on the MXU (vector-extended slot); VALU stays free.
    ones = jnp.ones((1, h.shape[0]), jnp.float32)
    s = jnp.dot(ones, h, preferred_element_type=jnp.float32)      # (1, Hp)
    sq = jnp.dot(ones, h * h, preferred_element_type=jnp.float32)  # (1, Hp)
    stats_ref[...] += jnp.concatenate([s, sq], axis=0)[None]      # (1, 2, Hp)


# ---------------------------------------------------------------------------
# Two-pass fallback, pass 2: Linear1 + ReLU + (BN-folded) Linear2.
# ---------------------------------------------------------------------------
def _apply_kernel(z_ref, w1_ref, b1_ref, w2_ref, b2_ref, o_ref):
    h = jnp.dot(z_ref[...], w1_ref[...], preferred_element_type=jnp.float32)
    h = jnp.maximum(h + b1_ref[...], 0.0)
    out = jnp.dot(h, w2_ref[...], preferred_element_type=jnp.float32)
    o_ref[...] = (out + b2_ref[...]).astype(o_ref.dtype)


def jigsaw_projection_head(z, params, *, tile_b=4096, force_two_pass=False):
    """JigsawProjectionHead forward.

    z: (B, rep_dim) float32
    params: w1 (D,H), b1 (1,H), gamma (1,H), beta (1,H), w2 (H,P), b2 (1,P)
            (weights stored transposed vs. PyTorch: (in, out)).
    returns: (B, P) float32
    """
    B, D = z.shape
    H = params["w1"].shape[1]
    P = params["w2"].shape[1]
    Hp = _round_up(H, LANE)            # 127 -> 128 (lane-dense hidden)

    # Zero-pad the hidden dim to a lane boundary; math stays exact because the
    # padded hidden features are 0 after ReLU and hit zero rows of w2.
    w1 = jnp.pad(params["w1"], ((0, 0), (0, Hp - H)))
    b1 = jnp.pad(params["b1"], ((0, 0), (0, Hp - H)))
    gamma = jnp.pad(params["gamma"], ((0, 0), (0, Hp - H)))
    beta = jnp.pad(params["beta"], ((0, 0), (0, Hp - H)))
    w2 = jnp.pad(params["w2"], ((0, Hp - H), (0, 0)))
    b2 = params["b2"]

    # ---------------- fused single-pass path ----------------
    per_row_bytes = 4 * (D + 3 * Hp + P)                 # z, h, temp, out (+slack)
    weight_bytes = 4 * (D * Hp + Hp * P + 4 * Hp + P)
    fused_ok = (B * per_row_bytes + weight_bytes) <= FUSED_VMEM_BUDGET
    if fused_ok and not force_two_pass:
        return pl.pallas_call(
            functools.partial(_fused_kernel, n_valid=B),
            out_shape=jax.ShapeDtypeStruct((B, P), jnp.float32),
            compiler_params=pltpu.CompilerParams(vmem_limit_bytes=VMEM_LIMIT),
        )(z, w1, b1, gamma, beta, w2, b2)

    # ---------------- two-pass fallback (very large B) ----------------
    tile = _round_up(min(tile_b, max(B // 2, SUBLANE)), SUBLANE)
    tiles_per_core = max(-(-B // (2 * tile)), 1)
    num_tiles = 2 * tiles_per_core
    b_pad = num_tiles * tile
    z_p = jnp.pad(z, ((0, b_pad - B), (0, 0))) if b_pad != B else z

    def full2(shape):
        return pl.BlockSpec(shape, lambda c, i: (0, 0))

    z_map = lambda c, i: (c * tiles_per_core + i, 0)

    # Pass 1: partial batch statistics (one stats block per TensorCore slice).
    stats_parts = pl.pallas_call(
        _bn_stats_kernel,
        out_shape=jax.ShapeDtypeStruct((2, 2, Hp), jnp.float32),
        grid=(2, tiles_per_core),
        in_specs=[pl.BlockSpec((tile, D), z_map),
                  full2((D, Hp)),
                  full2((1, Hp))],
        out_specs=pl.BlockSpec((1, 2, Hp), lambda c, i: (c, 0, 0)),
        compiler_params=pltpu.CompilerParams(
            dimension_semantics=("parallel", "arbitrary"),
            vmem_limit_bytes=VMEM_LIMIT),
    )(z_p, w1, b1)

    # Finalize BN on tiny (1, Hp) vectors.  Zero-padded batch rows contribute
    # exactly relu(b1) per row; subtract that analytically instead of masking
    # in-kernel.
    stats = stats_parts.sum(axis=0)                      # (2, Hp)
    pad_rows = float(b_pad - B)
    h_pad = jnp.maximum(b1, 0.0)
    sum_h = stats[0:1] - pad_rows * h_pad
    sum_h2 = stats[1:2] - pad_rows * h_pad * h_pad
    mean = sum_h / B
    var = jnp.maximum(sum_h2 / B - mean * mean, 0.0)     # biased variance
    inv_std = jax.lax.rsqrt(var + BN_EPS)
    scale = gamma * inv_std                              # (1, Hp)
    shift = beta - mean * scale                          # (1, Hp)
    # Fold the BN affine into Linear2:  (h*scale + shift) @ w2 + b2 == h @ w2f + b2f
    w2f = w2 * scale.T                                   # (Hp, P)
    b2f = shift @ w2 + b2                                # (1, P)

    # Pass 2: normalize (folded) + project.  Output keeps true width P.
    out_p = pl.pallas_call(
        _apply_kernel,
        out_shape=jax.ShapeDtypeStruct((b_pad, P), jnp.float32),
        grid=(num_tiles,),
        in_specs=[pl.BlockSpec((tile, D), lambda i: (i, 0)),
                  pl.BlockSpec((D, Hp), lambda i: (0, 0)),
                  pl.BlockSpec((1, Hp), lambda i: (0, 0)),
                  pl.BlockSpec((Hp, P), lambda i: (0, 0)),
                  pl.BlockSpec((1, P), lambda i: (0, 0))],
        out_specs=pl.BlockSpec((tile, P), lambda i: (i, 0)),
        compiler_params=pltpu.CompilerParams(
            dimension_semantics=("parallel",),
            vmem_limit_bytes=VMEM_LIMIT),
    )(z_p, w1, b1, w2f, b2f)

    return out_p if b_pad == B else out_p[:B]


def init_params(key, rep_dim, hidden_dim, proj_dim):
    """Synthetic params matching the PyTorch layer shapes, stored as (in, out)."""
    k1, k2, k3, k4 = jax.random.split(key, 4)
    w1 = jax.random.normal(k1, (rep_dim, hidden_dim), jnp.float32) / jnp.sqrt(rep_dim)
    b1 = jax.random.normal(k2, (1, hidden_dim), jnp.float32) * 0.01
    w2 = jax.random.normal(k3, (hidden_dim, proj_dim), jnp.float32) / jnp.sqrt(hidden_dim)
    b2 = jax.random.normal(k4, (1, proj_dim), jnp.float32) * 0.01
    gamma = jnp.ones((1, hidden_dim), jnp.float32)
    beta = jnp.zeros((1, hidden_dim), jnp.float32)
    return {"w1": w1, "b1": b1, "gamma": gamma, "beta": beta, "w2": w2, "b2": b2}


def reference_forward(z, p):
    """Pure-JAX reference (PyTorch training-mode BatchNorm1d semantics)."""
    h = z @ p["w1"] + p["b1"]
    h = jnp.maximum(h, 0.0)
    mean = h.mean(axis=0, keepdims=True)
    var = ((h - mean) ** 2).mean(axis=0, keepdims=True)   # biased variance
    h = (h - mean) / jnp.sqrt(var + BN_EPS) * p["gamma"] + p["beta"]
    return h @ p["w2"] + p["b2"]


if __name__ == "__main__":
    # representation_dim=32, hidden (architecture output_dim)=127, projection_shape=64
    REP_DIM, HIDDEN, PROJ = 32, 127, 64

    key = jax.random.PRNGKey(0)
    k_z, k_p, k_z2, k_z3 = jax.random.split(key, 4)
    params = init_params(k_p, REP_DIM, HIDDEN, PROJ)

    fwd = jax.jit(jigsaw_projection_head,
                  static_argnames=("tile_b", "force_two_pass"))

    # --- fused single-pass path, batch multiple of 8 ---
    B = 8
    z = jax.random.normal(k_z, (B, REP_DIM), jnp.float32)
    out = jax.block_until_ready(fwd(z, params))
    ref = reference_forward(z, params)
    assert out.shape == (B, PROJ), out.shape
    assert jnp.allclose(out, ref, atol=2e-4, rtol=2e-4), float(jnp.abs(out - ref).max())

    # --- fused path, non-multiple-of-8 batch ---
    B2 = 20
    z2 = jax.random.normal(k_z2, (B2, REP_DIM), jnp.float32)
    out2 = jax.block_until_ready(fwd(z2, params))
    ref2 = reference_forward(z2, params)
    assert out2.shape == (B2, PROJ), out2.shape
    assert jnp.allclose(out2, ref2, atol=2e-4, rtol=2e-4), float(jnp.abs(out2 - ref2).max())

    # --- two-pass fallback path: batch padding + analytic stats correction ---
    out2_tp = jax.block_until_ready(fwd(z2, params, tile_b=8, force_two_pass=True))
    assert out2_tp.shape == (B2, PROJ), out2_tp.shape
    assert jnp.allclose(out2_tp, ref2, atol=2e-4, rtol=2e-4), float(jnp.abs(out2_tp - ref2).max())

    # --- two-pass fallback path: tile evenly divides batch (no pad, no slice) ---
    B3 = 64
    z3 = jax.random.normal(k_z3, (B3, REP_DIM), jnp.float32)
    out3 = jax.block_until_ready(fwd(z3, params, tile_b=16, force_two_pass=True))
    ref3 = reference_forward(z3, params)
    assert out3.shape == (B3, PROJ), out3.shape
    assert jnp.allclose(out3, ref3, atol=2e-4, rtol=2e-4), float(jnp.abs(out3 - ref3).max())

    print("KERNEL_OK")
</pallas_src>

<mosaic_0001>
module attributes {stable_mosaic.version = 11 : i64} {
  func.func @_fused_kernel(%arg0: memref<8x32xf32, #tpu.memory_space<vmem>>, %arg1: memref<32x128xf32, #tpu.memory_space<vmem>>, %arg2: memref<1x128xf32, #tpu.memory_space<vmem>>, %arg3: memref<1x128xf32, #tpu.memory_space<vmem>>, %arg4: memref<1x128xf32, #tpu.memory_space<vmem>>, %arg5: memref<128x64xf32, #tpu.memory_space<vmem>>, %arg6: memref<1x64xf32, #tpu.memory_space<vmem>>, %arg7: memref<8x64xf32, #tpu.memory_space<vmem>>) attributes {dimension_semantics = [], scalar_prefetch = 0 : i64, scratch_operands = 0 : i64, tpu.core_type = #tpu.core_type<tc>} {
    %c0 = arith.constant 0 : index
    %c0_0 = arith.constant 0 : index
    %0 = vector.load %arg0[%c0, %c0_0] : memref<8x32xf32, #tpu.memory_space<vmem>>, vector<8x32xf32>
    %c0_1 = arith.constant 0 : index
    %c0_2 = arith.constant 0 : index
    %1 = vector.load %arg1[%c0_1, %c0_2] : memref<32x128xf32, #tpu.memory_space<vmem>>, vector<32x128xf32>
    %cst = arith.constant dense<0.000000e+00> : vector<8x128xf32>
    %2 = tpu.matmul %0, %1, %cst {dimension_numbers = #tpu.dot_dimension_numbers<[1], [0], [0], [1], [0, 0, 1, 1], [], []>} : vector<8x32xf32>, vector<32x128xf32>, vector<8x128xf32> -> vector<8x128xf32>
    %c0_3 = arith.constant 0 : index
    %c0_4 = arith.constant 0 : index
    %3 = vector.load %arg2[%c0_3, %c0_4] : memref<1x128xf32, #tpu.memory_space<vmem>>, vector<1x128xf32>
    %4 = vector.broadcast %3 : vector<1x128xf32> to vector<8x128xf32>
    %5 = arith.addf %2, %4 : vector<8x128xf32>
    %cst_5 = arith.constant 0.000000e+00 : f32
    %6 = vector.broadcast %cst_5 : f32 to vector<8x128xf32>
    %7 = arith.maximumf %5, %6 : vector<8x128xf32>
    %cst_6 = arith.constant 1.000000e+00 : f32
    %8 = vector.broadcast %cst_6 : f32 to vector<1x8xf32>
    %cst_7 = arith.constant dense<0.000000e+00> : vector<1x128xf32>
    %9 = tpu.matmul %8, %7, %cst_7 {dimension_numbers = #tpu.dot_dimension_numbers<[1], [0], [0], [1], [0, 0, 1, 1], [], []>} : vector<1x8xf32>, vector<8x128xf32>, vector<1x128xf32> -> vector<1x128xf32>
    %10 = arith.mulf %7, %7 : vector<8x128xf32>
    %cst_8 = arith.constant dense<0.000000e+00> : vector<1x128xf32>
    %11 = tpu.matmul %8, %10, %cst_8 {dimension_numbers = #tpu.dot_dimension_numbers<[1], [0], [0], [1], [0, 0, 1, 1], [], []>} : vector<1x8xf32>, vector<8x128xf32>, vector<1x128xf32> -> vector<1x128xf32>
    %cst_9 = arith.constant 1.250000e-01 : f32
    %12 = vector.broadcast %cst_9 : f32 to vector<1x128xf32>
    %13 = arith.mulf %9, %12 : vector<1x128xf32>
    %cst_10 = arith.constant 1.250000e-01 : f32
    %14 = vector.broadcast %cst_10 : f32 to vector<1x128xf32>
    %15 = arith.mulf %11, %14 : vector<1x128xf32>
    %16 = arith.mulf %13, %13 : vector<1x128xf32>
    %17 = arith.subf %15, %16 : vector<1x128xf32>
    %cst_11 = arith.constant 0.000000e+00 : f32
    %18 = vector.broadcast %cst_11 : f32 to vector<1x128xf32>
    %19 = arith.maximumf %17, %18 : vector<1x128xf32>
    %cst_12 = arith.constant 9.99999974E-6 : f32
    %20 = vector.broadcast %cst_12 : f32 to vector<1x128xf32>
    %21 = arith.addf %19, %20 : vector<1x128xf32>
    %22 = math.rsqrt %21 : vector<1x128xf32>
    %c0_13 = arith.constant 0 : index
    %c0_14 = arith.constant 0 : index
    %23 = vector.load %arg3[%c0_13, %c0_14] : memref<1x128xf32, #tpu.memory_space<vmem>>, vector<1x128xf32>
    %24 = arith.mulf %23, %22 : vector<1x128xf32>
    %c0_15 = arith.constant 0 : index
    %c0_16 = arith.constant 0 : index
    %25 = vector.load %arg4[%c0_15, %c0_16] : memref<1x128xf32, #tpu.memory_space<vmem>>, vector<1x128xf32>
    %26 = arith.mulf %13, %24 : vector<1x128xf32>
    %27 = arith.subf %25, %26 : vector<1x128xf32>
    %28 = vector.broadcast %24 : vector<1x128xf32> to vector<8x128xf32>
    %29 = arith.mulf %7, %28 : vector<8x128xf32>
    %30 = vector.broadcast %27 : vector<1x128xf32> to vector<8x128xf32>
    %31 = arith.addf %29, %30 : vector<8x128xf32>
    %c0_17 = arith.constant 0 : index
    %c0_18 = arith.constant 0 : index
    %32 = vector.load %arg5[%c0_17, %c0_18] : memref<128x64xf32, #tpu.memory_space<vmem>>, vector<128x64xf32>
    %cst_19 = arith.constant dense<0.000000e+00> : vector<8x64xf32>
    %33 = tpu.matmul %31, %32, %cst_19 {dimension_numbers = #tpu.dot_dimension_numbers<[1], [0], [0], [1], [0, 0, 1, 1], [], []>} : vector<8x128xf32>, vector<128x64xf32>, vector<8x64xf32> -> vector<8x64xf32>
    %c0_20 = arith.constant 0 : index
    %c0_21 = arith.constant 0 : index
    %34 = vector.load %arg6[%c0_20, %c0_21] : memref<1x64xf32, #tpu.memory_space<vmem>>, vector<1x64xf32>
    %35 = vector.broadcast %34 : vector<1x64xf32> to vector<8x64xf32>
    %36 = arith.addf %33, %35 : vector<8x64xf32>
    %c0_22 = arith.constant 0 : index
    %c0_23 = arith.constant 0 : index
    %37 = vector.load %arg7[%c0_22, %c0_23] : memref<8x64xf32, #tpu.memory_space<vmem>>, vector<8x64xf32>
    tpu.vector_store %arg7[%c0_22, %c0_23], %36 {strides = array<i32>} : memref<8x64xf32, #tpu.memory_space<vmem>>, vector<8x64xf32>,
    return
  }
}

</mosaic_0001>

<llo_original>
// kernel: jigsaw_projection_head.1
$region0: #{jigsaw_projection_head.1}
  #allocation0 [shape = 'u32[]', space=smem, size = 0x4, offset = 0x4, fixed_abs, tag = 'smem constant byte address 0x4 - core index']
  #allocation1 [shape = 'u32[144,128]{1,0:T(1,128)}', space=vmem, size = 0x12000, scoped, tag = 'internal scratch']
  %s0 = inlined_call_operand.vmem [shape: f32[8,32], index: 0, kind: input, shape index: {}]
  %s1 = inlined_call_operand.vmem [shape: f32[32,128], index: 1, kind: input, shape index: {}]
  %s2 = inlined_call_operand.vmem [shape: f32[1,128], index: 2, kind: input, shape index: {}]
  %s3 = inlined_call_operand.vmem [shape: f32[1,128], index: 3, kind: input, shape index: {}]
  %s4 = inlined_call_operand.vmem [shape: f32[1,128], index: 4, kind: input, shape index: {}]
  %s5 = inlined_call_operand.vmem [shape: f32[128,64], index: 5, kind: input, shape index: {}]
  %s6 = inlined_call_operand.vmem [shape: f32[1,64], index: 6, kind: input, shape index: {}]
  %s7 = inlined_call_operand.hbm [shape: f32[8,64], index: 7, kind: output, shape index: {}]
  %s8 = sld [smem:[#allocation0]]
  $region38: #{jigsaw_projection_head.1} parent=0
    _
  %s10 = ssub.s32 1, %s8
  %s11 = scalar_select 0, %s10, %s8
  $region1: #{jigsaw_projection_head.1} parent=0
    #allocation2 [shape = 'u8[4096]{0}', space=vmem, size = 0x1000, scoped, tag = 'output window, operand 0, single buffered']
    #allocation3 [shape = 's32[1]{0}', space=sflag, size = 0x4, scoped, tag = 'scoped memory for jigsaw_projection_head.1']
    %12 = vsyncpa [#allocation3], 0
    // Predicated region
    $region2: #{jigsaw_projection_head.1} parent=1 // pred_check
      _
    $region3: #{jigsaw_projection_head.1} parent=1 // pred_check_branch
      %14 = sbr.rel (0) target = $region5
    $region4: #{jigsaw_projection_head.1} parent=1 // pred_region
      _
    $region5: #{jigsaw_projection_head.1} parent=1 // pred_fallthru
      _
    // Predicated region
    $region6: #{jigsaw_projection_head.1} parent=1 // pred_check
      _
    $region7: #{jigsaw_projection_head.1} parent=1 // pred_check_branch
      %16 = sbr.rel (0) target = $region9
    $region8: #{jigsaw_projection_head.1} parent=1 // pred_region
      _
    $region9: #{jigsaw_projection_head.1} parent=1 // pred_fallthru
      _
    // Predicated region
    $region10: #{jigsaw_projection_head.1} parent=1 // pred_check
      _
    $region11: #{jigsaw_projection_head.1} parent=1 // pred_check_branch
      %18 = sbr.rel (0) target = $region13
    $region12: #{jigsaw_projection_head.1} parent=1 // pred_region
      _
    $region13: #{jigsaw_projection_head.1} parent=1 // pred_fallthru
      _
    // Predicated region
    $region14: #{jigsaw_projection_head.1} parent=1 // pred_check
      _
    $region15: #{jigsaw_projection_head.1} parent=1 // pred_check_branch
      %20 = sbr.rel (0) target = $region17
    $region16: #{jigsaw_projection_head.1} parent=1 // pred_region
      _
    $region17: #{jigsaw_projection_head.1} parent=1 // pred_fallthru
      _
    // Predicated region
    $region18: #{jigsaw_projection_head.1} parent=1 // pred_check
      _
    $region19: #{jigsaw_projection_head.1} parent=1 // pred_check_branch
      %22 = sbr.rel (0) target = $region21
    $region20: #{jigsaw_projection_head.1} parent=1 // pred_region
      _
    $region21: #{jigsaw_projection_head.1} parent=1 // pred_fallthru
      _
    // Predicated region
    $region22: #{jigsaw_projection_head.1} parent=1 // pred_check
      _
    $region23: #{jigsaw_projection_head.1} parent=1 // pred_check_branch
      %24 = sbr.rel (0) target = $region25
    $region24: #{jigsaw_projection_head.1} parent=1 // pred_region
      _
    $region25: #{jigsaw_projection_head.1} parent=1 // pred_fallthru
      _
    // Predicated region
    $region26: #{jigsaw_projection_head.1} parent=1 // pred_check
      _
    $region27: #{jigsaw_projection_head.1} parent=1 // pred_check_branch
      %26 = sbr.rel (0) target = $region29
    $region28: #{jigsaw_projection_head.1} parent=1 // pred_region
      _
    $region29: #{jigsaw_projection_head.1} parent=1 // pred_fallthru
      _
    %v27 = vld [vmem:[%s0] sm:$0xff]
    %v28 = vld [vmem:[%s1] sm:$0xff]
    %v29 = vld [vmem:[%s1 + $0x8] sm:$0xff]
    %v30 = vld [vmem:[%s1 + $0x10] sm:$0xff]
    %v31 = vld [vmem:[%s1 + $0x18] sm:$0xff]
    %v32 = vld [vmem:[%s2] sm:$0x1]
    %v34 = vlaneseq
    %v35 = vshrl.u32 %v34, 7
    %v36 = vsub.s32 0, %v35
    %v37 = vrot.slane %v32, %v36
    %vm39 = vcmask 261120
    %v41 = vsel %vm39, %v27, 0
    %43 = vmatprep.subr.mxu0 0.0
    %44 = vmatpush1.msra.mxu0 %v28
    %45 = vmatprep.subr.mxu0 0.0
    %46 = vmatpush1.msra.mxu0 %v29
    %47 = vmatprep.subr.mxu0 0.0
    %48 = vmatpush1.msra.mxu0 %v30
    %49 = vmatprep.subr.mxu0 0.0
    %50 = vmatpush1.msra.mxu0 %v31
    %51 = vmatprep.subr.mxu0 0.0
    %52 = vmatpush1.msra.mxu0 0.0
    %53 = vmatprep.subr.mxu0 0.0
    %54 = vmatpush1.msra.mxu0 0.0
    %55 = vmatprep.subr.mxu0 0.0
    %56 = vmatpush1.msra.mxu0 0.0
    %57 = vmatprep.subr.mxu0 0.0
    %58 = vmatpush1.msra.mxu0 0.0
    %59 = vmatprep.subr.mxu0 0.0
    %60 = vmatpush1.msra.mxu0 0.0
    %61 = vmatprep.subr.mxu0 0.0
    %62 = vmatpush1.msra.mxu0 0.0
    %63 = vmatprep.subr.mxu0 0.0
    %64 = vmatpush1.msra.mxu0 0.0
    %65 = vmatprep.subr.mxu0 0.0
    %66 = vmatpush1.msra.mxu0 0.0
    %67 = vmatprep.subr.mxu0 0.0
    %68 = vmatpush1.msra.mxu0 0.0
    %69 = vmatprep.subr.mxu0 0.0
    %70 = vmatpush1.msra.mxu0 0.0
    %71 = vmatprep.subr.mxu0 0.0
    %72 = vmatpush1.msra.mxu0 0.0
    %73 = vmatprep.subr.mxu0 0.0
    %74 = vmatpush1.msra.mxu0 0.0
    %75 = vmatprep.subr.mxu0 0.0
    %76 = vmatpush1.msra.mxu0 0.0
    %77 = vmatprep.subr.mxu0 0.0
    %78 = vmatpush1.msra.mxu0 0.0
    %79 = vmatprep.subr.mxu0 0.0
    %80 = vmatpush1.msra.mxu0 0.0
    %81 = vmatprep.subr.mxu0 0.0
    %82 = vmatpush1.msra.mxu0 0.0
    %83 = vmatprep.subr.mxu0 0.0
    %84 = vmatpush1.msra.mxu0 0.0
    %85 = vmatprep.subr.mxu0 0.0
    %86 = vmatpush1.msra.mxu0 0.0
    %87 = vmatprep.subr.mxu0 0.0
    %88 = vmatpush1.msra.mxu0 0.0
    %89 = vmatprep.subr.mxu0 0.0
    %90 = vmatpush1.msra.mxu0 0.0
    %91 = vmatprep.subr.mxu0 0.0
    %92 = vmatpush1.msra.mxu0 0.0
    %93 = vmatprep.subr.mxu0 0.0
    %94 = vmatpush1.msra.mxu0 0.0
    %95 = vmatprep.subr.mxu0 0.0
    %96 = vmatpush1.msra.mxu0 0.0
    %97 = vmatprep.subr.mxu0 0.0
    %98 = vmatpush1.msra.mxu0 0.0
    %99 = vmatprep.subr.mxu0 0.0
    %100 = vmatpush1.msra.mxu0 0.0
    %101 = vmatprep.subr.mxu0 0.0
    %102 = vmatpush1.msra.mxu0 0.0
    %103 = vmatprep.subr.mxu0 0.0
    %104 = vmatpush1.msra.mxu0 0.0
    %105 = vmatprep.subr.mxu0 0.0
    %106 = vmatpush1.msra.mxu0 0.0
    %107 = vmatprep.mubr.f32.mxu0 0.0
    %108 = vmatmul.mubr.f32.gmra.mrb[0].mxu0 %v41
    %v109 = vpop.f32.mrb[0].mxu0
    %v110 = vadd.f32 %v37, %v109
    %v111 = vpop.f32.mrb[0].mxu0
    %112 = vdwg.mxu0
    %v113 = vmax.f32 %v110, 0.0
    %vm114 = vcmask 64512
    %v116 = vsel %vm114, 1.0, 0
    %118 = vmatprep.subr.mxu0 0.0
    %119 = vmatpush1.msra.mxu0 %v113
    %120 = vmatprep.subr.mxu0 0.0
    %121 = vmatpush1.msra.mxu0 0.0
    %122 = vmatprep.subr.mxu0 0.0
    %123 = vmatpush1.msra.mxu0 0.0
    %124 = vmatprep.subr.mxu0 0.0
    %125 = vmatpush1.msra.mxu0 0.0
    %126 = vmatprep.subr.mxu0 0.0
    %127 = vmatpush1.msra.mxu0 0.0
    %128 = vmatprep.subr.mxu0 0.0
    %129 = vmatpush1.msra.mxu0 0.0
    %130 = vmatprep.subr.mxu0 0.0
    %131 = vmatpush1.msra.mxu0 0.0
    %132 = vmatprep.subr.mxu0 0.0
    %133 = vmatpush1.msra.mxu0 0.0
    %134 = vmatprep.subr.mxu0 0.0
    %135 = vmatpush1.msra.mxu0 0.0
    %136 = vmatprep.subr.mxu0 0.0
    %137 = vmatpush1.msra.mxu0 0.0
    %138 = vmatprep.subr.mxu0 0.0
    %139 = vmatpush1.msra.mxu0 0.0
    %140 = vmatprep.subr.mxu0 0.0
    %141 = vmatpush1.msra.mxu0 0.0
    %142 = vmatprep.subr.mxu0 0.0
    %143 = vmatpush1.msra.mxu0 0.0
    %144 = vmatprep.subr.mxu0 0.0
    %145 = vmatpush1.msra.mxu0 0.0
    %146 = vmatprep.subr.mxu0 0.0
    %147 = vmatpush1.msra.mxu0 0.0
    %148 = vmatprep.subr.mxu0 0.0
    %149 = vmatpush1.msra.mxu0 0.0
    %150 = vmatprep.subr.mxu0 0.0
    %151 = vmatpush1.msra.mxu0 0.0
    %152 = vmatprep.subr.mxu0 0.0
    %153 = vmatpush1.msra.mxu0 0.0
    %154 = vmatprep.subr.mxu0 0.0
    %155 = vmatpush1.msra.mxu0 0.0
    %156 = vmatprep.subr.mxu0 0.0
    %157 = vmatpush1.msra.mxu0 0.0
    %158 = vmatprep.subr.mxu0 0.0
    %159 = vmatpush1.msra.mxu0 0.0
    %160 = vmatprep.subr.mxu0 0.0
    %161 = vmatpush1.msra.mxu0 0.0
    %162 = vmatprep.subr.mxu0 0.0
    %163 = vmatpush1.msra.mxu0 0.0
    %164 = vmatprep.subr.mxu0 0.0
    %165 = vmatpush1.msra.mxu0 0.0
    %166 = vmatprep.subr.mxu0 0.0
    %167 = vmatpush1.msra.mxu0 0.0
    %168 = vmatprep.subr.mxu0 0.0
    %169 = vmatpush1.msra.mxu0 0.0
    %170 = vmatprep.subr.mxu0 0.0
    %171 = vmatpush1.msra.mxu0 0.0
    %172 = vmatprep.subr.mxu0 0.0
    %173 = vmatpush1.msra.mxu0 0.0
    %174 = vmatprep.subr.mxu0 0.0
    %175 = vmatpush1.msra.mxu0 0.0
    %176 = vmatprep.subr.mxu0 0.0
    %177 = vmatpush1.msra.mxu0 0.0
    %178 = vmatprep.subr.mxu0 0.0
    %179 = vmatpush1.msra.mxu0 0.0
    %180 = vmatprep.subr.mxu0 0.0
    %181 = vmatpush1.msra.mxu0 0.0
    %182 = vmatprep.mubr.f32.mxu0 0.0
    %183 = vmatmul.mubr.f32.gmra.mrb[0].mxu0 %v116
    %v184 = vpop.f32.mrb[0].mxu0
    %v185 = vadd.f32 0.0, %v184
    %v186 = vpop.f32.mrb[0].mxu0
    %187 = vdwg.mxu0
    %v188 = vmul.f32 %v113, %v113
    %189 = vmatprep.subr.mxu0 0.0
    %190 = vmatpush1.msra.mxu0 %v188
    %191 = vmatprep.subr.mxu0 0.0
    %192 = vmatpush1.msra.mxu0 0.0
    %193 = vmatprep.subr.mxu0 0.0
    %194 = vmatpush1.msra.mxu0 0.0
    %195 = vmatprep.subr.mxu0 0.0
    %196 = vmatpush1.msra.mxu0 0.0
    %197 = vmatprep.subr.mxu0 0.0
    %198 = vmatpush1.msra.mxu0 0.0
    %199 = vmatprep.subr.mxu0 0.0
    %200 = vmatpush1.msra.mxu0 0.0
    %201 = vmatprep.subr.mxu0 0.0
    %202 = vmatpush1.msra.mxu0 0.0
    %203 = vmatprep.subr.mxu0 0.0
    %204 = vmatpush1.msra.mxu0 0.0
    %205 = vmatprep.subr.mxu0 0.0
    %206 = vmatpush1.msra.mxu0 0.0
    %207 = vmatprep.subr.mxu0 0.0
    %208 = vmatpush1.msra.mxu0 0.0
    %209 = vmatprep.subr.mxu0 0.0
    %210 = vmatpush1.msra.mxu0 0.0
    %211 = vmatprep.subr.mxu0 0.0
    %212 = vmatpush1.msra.mxu0 0.0
    %213 = vmatprep.subr.mxu0 0.0
    %214 = vmatpush1.msra.mxu0 0.0
    %215 = vmatprep.subr.mxu0 0.0
    %216 = vmatpush1.msra.mxu0 0.0
    %217 = vmatprep.subr.mxu0 0.0
    %218 = vmatpush1.msra.mxu0 0.0
    %219 = vmatprep.subr.mxu0 0.0
    %220 = vmatpush1.msra.mxu0 0.0
    %221 = vmatprep.subr.mxu0 0.0
    %222 = vmatpush1.msra.mxu0 0.0
    %223 = vmatprep.subr.mxu0 0.0
    %224 = vmatpush1.msra.mxu0 0.0
    %225 = vmatprep.subr.mxu0 0.0
    %226 = vmatpush1.msra.mxu0 0.0
    %227 = vmatprep.subr.mxu0 0.0
    %228 = vmatpush1.msra.mxu0 0.0
    %229 = vmatprep.subr.mxu0 0.0
    %230 = vmatpush1.msra.mxu0 0.0
    %231 = vmatprep.subr.mxu0 0.0
    %232 = vmatpush1.msra.mxu0 0.0
    %233 = vmatprep.subr.mxu0 0.0
    %234 = vmatpush1.msra.mxu0 0.0
    %235 = vmatprep.subr.mxu0 0.0
    %236 = vmatpush1.msra.mxu0 0.0
    %237 = vmatprep.subr.mxu0 0.0
    %238 = vmatpush1.msra.mxu0 0.0
    %239 = vmatprep.subr.mxu0 0.0
    %240 = vmatpush1.msra.mxu0 0.0
    %241 = vmatprep.subr.mxu0 0.0
    %242 = vmatpush1.msra.mxu0 0.0
    %243 = vmatprep.subr.mxu0 0.0
    %244 = vmatpush1.msra.mxu0 0.0
    %245 = vmatprep.subr.mxu0 0.0
    %246 = vmatpush1.msra.mxu0 0.0
    %247 = vmatprep.subr.mxu0 0.0
    %248 = vmatpush1.msra.mxu0 0.0
    %249 = vmatprep.subr.mxu0 0.0
    %250 = vmatpush1.msra.mxu0 0.0
    %251 = vmatprep.subr.mxu0 0.0
    %252 = vmatpush1.msra.mxu0 0.0
    %253 = vmatprep.mubr.f32.mxu0 0.0
    %254 = vmatmul.mubr.f32.gmra.mrb[0].mxu0 %v116
    %v255 = vpop.f32.mrb[0].mxu0
    %v256 = vadd.f32 0.0, %v255
    %v257 = vpop.f32.mrb[0].mxu0
    %258 = vdwg.mxu0
    %v259 = vmul.f32 %v185, 0.125
    %v260 = vmul.f32 %v256, 0.125
    %v261 = vmul.f32 %v259, %v259
    %v262 = vsub.f32 %v260, %v261
    %v263 = vmax.f32 %v262, 0.0
    %v264 = vadd.f32 %v263, 1e-05
    %v265 = vrsqrt.pop %v264
    %v266 = vld [vmem:[%s3] sm:$0x1]
    %v267 = vmul.f32 %v266, %v265
    %v268 = vld [vmem:[%s4] sm:$0x1]
    %v269 = vmul.f32 %v259, %v267
    %v270 = vsub.f32 %v268, %v269
    %v272 = vlaneseq
    %v273 = vshrl.u32 %v272, 7
    %v274 = vsub.s32 0, %v273
    %v275 = vrot.slane %v267, %v274
    %v277 = vmul.f32 %v113, %v275
    %v279 = vlaneseq
    %v280 = vshrl.u32 %v279, 7
    %v281 = vsub.s32 0, %v280
    %v282 = vrot.slane %v270, %v281
    %v284 = vadd.f32 %v277, %v282
    %v285 = vld [vmem:[%s5] sm:$0xff]
    %v286 = vld [vmem:[%s5 + $0x8] sm:$0xff]
    %v287 = vld [vmem:[%s5 + $0x10] sm:$0xff]
    %v288 = vld [vmem:[%s5 + $0x18] sm:$0xff]
    %v289 = vld [vmem:[%s5 + $0x20] sm:$0xff]
    %v290 = vld [vmem:[%s5 + $0x28] sm:$0xff]
    %v291 = vld [vmem:[%s5 + $0x30] sm:$0xff]
    %v292 = vld [vmem:[%s5 + $0x38] sm:$0xff]
    %v293 = vld [vmem:[%s5 + $0x40] sm:$0xff]
    %v294 = vld [vmem:[%s5 + $0x48] sm:$0xff]
    %v295 = vld [vmem:[%s5 + $0x50] sm:$0xff]
    %v296 = vld [vmem:[%s5 + $0x58] sm:$0xff]
    %v297 = vld [vmem:[%s5 + $0x60] sm:$0xff]
    %v298 = vld [vmem:[%s5 + $0x68] sm:$0xff]
    %v299 = vld [vmem:[%s5 + $0x70] sm:$0xff]
    %v300 = vld [vmem:[%s5 + $0x78] sm:$0xff]
    %v301 = vld [vmem:[%s6] sm:$0x1]
    %v303 = vlaneseq
    %v304 = vshrl.u32 %v303, 7
    %v305 = vsub.s32 0, %v304
    %v306 = vrot.slane %v301, %v305
    %308 = vmatprep.subr.mxu0 0.0
    %309 = vmatpush1.msra.mxu0 %v285
    %310 = vmatprep.subr.mxu0 0.0
    %311 = vmatpush1.msra.mxu0 %v286
    %312 = vmatprep.subr.mxu0 0.0
    %313 = vmatpush1.msra.mxu0 %v287
    %314 = vmatprep.subr.mxu0 0.0
    %315 = vmatpush1.msra.mxu0 %v288
    %316 = vmatprep.subr.mxu0 0.0
    %317 = vmatpush1.msra.mxu0 %v289
    %318 = vmatprep.subr.mxu0 0.0
    %319 = vmatpush1.msra.mxu0 %v290
    %320 = vmatprep.subr.mxu0 0.0
    %321 = vmatpush1.msra.mxu0 %v291
    %322 = vmatprep.subr.mxu0 0.0
    %323 = vmatpush1.msra.mxu0 %v292
    %324 = vmatprep.subr.mxu0 0.0
    %325 = vmatpush1.msra.mxu0 %v293
    %326 = vmatprep.subr.mxu0 0.0
    %327 = vmatpush1.msra.mxu0 %v294
    %328 = vmatprep.subr.mxu0 0.0
    %329 = vmatpush1.msra.mxu0 %v295
    %330 = vmatprep.subr.mxu0 0.0
    %331 = vmatpush1.msra.mxu0 %v296
    %332 = vmatprep.subr.mxu0 0.0
    %333 = vmatpush1.msra.mxu0 %v297
    %334 = vmatprep.subr.mxu0 0.0
    %335 = vmatpush1.msra.mxu0 %v298
    %336 = vmatprep.subr.mxu0 0.0
    %337 = vmatpush1.msra.mxu0 %v299
    %338 = vmatprep.subr.mxu0 0.0
    %339 = vmatpush1.msra.mxu0 %v300
    %340 = vmatprep.subr.mxu0 0.0
    %341 = vmatpush1.msra.mxu0 0.0
    %342 = vmatprep.subr.mxu0 0.0
    %343 = vmatpush1.msra.mxu0 0.0
    %344 = vmatprep.subr.mxu0 0.0
    %345 = vmatpush1.msra.mxu0 0.0
    %346 = vmatprep.subr.mxu0 0.0
    %347 = vmatpush1.msra.mxu0 0.0
    %348 = vmatprep.subr.mxu0 0.0
    %349 = vmatpush1.msra.mxu0 0.0
    %350 = vmatprep.subr.mxu0 0.0
    %351 = vmatpush1.msra.mxu0 0.0
    %352 = vmatprep.subr.mxu0 0.0
    %353 = vmatpush1.msra.mxu0 0.0
    %354 = vmatprep.subr.mxu0 0.0
    %355 = vmatpush1.msra.mxu0 0.0
    %356 = vmatprep.subr.mxu0 0.0
    %357 = vmatpush1.msra.mxu0 0.0
    %358 = vmatprep.subr.mxu0 0.0
    %359 = vmatpush1.msra.mxu0 0.0
    %360 = vmatprep.subr.mxu0 0.0
    %361 = vmatpush1.msra.mxu0 0.0
    %362 = vmatprep.subr.mxu0 0.0
    %363 = vmatpush1.msra.mxu0 0.0
    %364 = vmatprep.subr.mxu0 0.0
    %365 = vmatpush1.msra.mxu0 0.0
    %366 = vmatprep.subr.mxu0 0.0
    %367 = vmatpush1.msra.mxu0 0.0
    %368 = vmatprep.subr.mxu0 0.0
    %369 = vmatpush1.msra.mxu0 0.0
    %370 = vmatprep.subr.mxu0 0.0
    %371 = vmatpush1.msra.mxu0 0.0
    %372 = vmatprep.mubr.f32.mxu0 0.0
    %373 = vmatmul.mubr.f32.gmra.mrb[0].mxu0 %v284
    %v374 = vpop.f32.mrb[0].mxu0
    %v375 = vadd.f32 %v306, %v374
    %v376 = vpop.f32.mrb[0].mxu0
    %377 = vdwg.mxu0
    %vm378 = vcmask 523264
    %379 = vst.msk [vmem:[#allocation2] sm:$0xff] %vm378, %v375
    // Predicated region
    $region30: #{jigsaw_projection_head.1} parent=1 // pred_check
      _
    $region31: #{jigsaw_projection_head.1} parent=1 // pred_check_branch
      %381 = sbr.rel (0) target = $region33
    $region32: #{jigsaw_projection_head.1} parent=1 // pred_region
      %s383 = ssub.s32 128, 128
      %384 = vsyncadd [#allocation3], %s383
      %s386 = sshll.u32 [#allocation2], 4
      %s387 = int_to_ptr.vmem [resolvable:$true] %s386
      %389 = dma.vmem_to_hbm [thread:$0]  %s387, 128, %s7, [#allocation3]
    $region33: #{jigsaw_projection_head.1} parent=1 // pred_fallthru
      _
    // Predicated region
    $region34: #{jigsaw_projection_head.1} parent=1 // pred_check
      _
    $region35: #{jigsaw_projection_head.1} parent=1 // pred_check_branch
      %391 = sbr.rel (0) target = $region37
    $region36: #{jigsaw_projection_head.1} parent=1 // pred_region
      %392 = dma.done [#allocation3], 128
    $region37: #{jigsaw_projection_head.1} parent=1 // pred_fallthru
      _
    %393 = vsyncpa [#allocation3], 1

</llo_original>
